<compile_context>
chip_gen: v7x
topology: tpu7x:2x2x1
jax: 0.10.0
libtpu: 0.0.40
codegen_flags: <defaults>
</compile_context>

<pallas_src>
import math

import numpy as np

import jax
import jax.numpy as jnp
from jax.experimental import pallas as pl
from jax.experimental.pallas import tpu as pltpu

LANE = 128
SUBLANE = 8


def round_up(x, m):
    return ((x + m - 1) // m) * m


def cdiv(a, b):
    return (a + b - 1) // b


# ----------------------------------------------------------------------------
# DimCalculator (method='linear'): linearly interpolate hidden dims.
# TODO(synk): exact DimCalculator implementation is not in the reference; a
# linear interpolation is used for method='linear'.
# ----------------------------------------------------------------------------
def calculate_dims_linear(input_dim, output_dim, num_layers):
    dims = [
        int(round(input_dim + (output_dim - input_dim) * i / num_layers))
        for i in range(num_layers + 1)
    ]
    dims[0] = input_dim
    dims[-1] = output_dim
    return dims


def xavier_uniform(key, fan_in, fan_out, dtype=jnp.float32):
    bound = math.sqrt(6.0 / (fan_in + fan_out))
    return jax.random.uniform(
        key, (fan_in, fan_out), dtype=dtype, minval=-bound, maxval=bound
    )


def _pad2d(a, rows, cols):
    return jnp.pad(a, ((0, rows - a.shape[0]), (0, cols - a.shape[1])))


# ----------------------------------------------------------------------------
# Pure-JAX reference mirroring the kernel's numerics (bf16 MXU operands,
# f32 accumulation / epilogue) — also used as the large-model fallback.
# ----------------------------------------------------------------------------
def backbone_ref(x, layer_params, skip_params, *, activation="relu",
                 use_residual=False, matmul_dtype=jnp.bfloat16,
                 gelu_approximate=False):
    def act(h):
        if activation == "relu":
            return jnp.maximum(h, 0.0)
        elif activation == "tanh":
            return jnp.tanh(h)
        return jax.nn.gelu(h, approximate=gelu_approximate)

    n = len(layer_params)
    xm = x.astype(matmul_dtype)
    h = xm
    for i, (w, b) in enumerate(layer_params):
        h = jnp.dot(h.astype(matmul_dtype), w.astype(matmul_dtype),
                    preferred_element_type=jnp.float32) + b.reshape(1, -1)
        if i < n - 1:
            h = act(h)
    if use_residual:
        if isinstance(skip_params, tuple):
            h = (h
                 + jnp.dot(xm, skip_params[0].astype(matmul_dtype),
                           preferred_element_type=jnp.float32)
                 + skip_params[1].reshape(1, -1))
        else:
            # TODO(synk): identity residual uses the bf16 copy of x (tiny
            # rounding vs the f32 torch path); kernel matches this.
            h = h + xm.astype(jnp.float32)
    return h


# ----------------------------------------------------------------------------
# Fused kernel: all layers for one batch tile.  Weights / packed biases are
# whole-array blocks pinned (single-buffered) in VMEM across the batch grid.
# ----------------------------------------------------------------------------
def make_backbone_kernel(num_layers, widths, out_width, activation,
                         use_residual, linear_skip, epilogue_dtype,
                         gelu_approximate):
    def act(h):
        if activation == "relu":
            return jnp.maximum(h, 0.0)
        elif activation == "tanh":
            return jnp.tanh(h)
        elif activation == "gelu":
            return jax.nn.gelu(h, approximate=gelu_approximate)
        raise ValueError(f"unsupported activation: {activation}")

    def kernel(*refs):
        x_ref = refs[0]
        b_ref = refs[1]                              # (n_bias, max_pad) f32
        w_refs = refs[2:2 + num_layers]              # bf16 padded weights
        ws_ref = refs[2 + num_layers] if linear_skip else None
        out_ref = refs[-1]

        x = x_ref[...]                               # (tile_b, in_pad) bf16
        h = x
        for i in range(num_layers):
            acc = jnp.dot(h, w_refs[i][...],
                          preferred_element_type=jnp.float32)
            b = b_ref[i:i + 1, :widths[i]]           # (1, width) f32, 128-aligned
            if i < num_layers - 1:
                z = acc.astype(epilogue_dtype) + b.astype(epilogue_dtype)
                h = act(z).astype(x.dtype)           # bf16 for the next matmul
            else:
                h = acc + b                          # final layer stays f32

        if use_residual:
            # Skip is computed AFTER the chain so nothing extra stays live
            # across the layers (x block is resident in VMEM anyway).
            if linear_skip:
                skip = jnp.dot(x, ws_ref[...],
                               preferred_element_type=jnp.float32)
                skip = skip + b_ref[num_layers:num_layers + 1, :out_width]
            else:
                skip = x.astype(jnp.float32)
            h = h + skip

        out_ref[...] = h.astype(out_ref.dtype)

    return kernel


# ----------------------------------------------------------------------------
# Wrapper: pads feature dims to 128 lanes, VMEM-budgeted balanced batch tiles,
# packs params (bf16 weights, one f32 bias matrix), runs a parallel batch grid
# and slices the real output back out.
# ----------------------------------------------------------------------------
def backbone_forward(x, layer_params, skip_params, *, activation="relu",
                     use_residual=False, tile_b_max=2048,
                     matmul_dtype=jnp.bfloat16, out_dtype=None,
                     epilogue_dtype=jnp.float32, gelu_approximate=False):
    num_layers = len(layer_params)
    linear_skip = use_residual and isinstance(skip_params, tuple)

    batch, input_dim = x.shape
    output_dim = layer_params[-1][0].shape[1]
    out_dtype = x.dtype if out_dtype is None else out_dtype

    if use_residual and not linear_skip and input_dim != output_dim:
        raise ValueError("identity skip requires input_dim == output_dim")

    # lane-dense padded feature dims (multiples of 128)
    in_pad = round_up(input_dim, LANE)
    pad_dims = [in_pad] + [round_up(w.shape[1], LANE) for w, _ in layer_params]
    out_pad = pad_dims[-1]
    max_pad = max(pad_dims)
    widths = tuple(pad_dims[1:])

    # ---- parameter packing: bf16 padded weights, one packed f32 bias matrix
    w_packed = [_pad2d(w, pad_dims[i], pad_dims[i + 1]).astype(matmul_dtype)
                for i, (w, _) in enumerate(layer_params)]
    bias_rows = [jnp.pad(b.reshape(-1).astype(jnp.float32),
                         (0, max_pad - b.size)) for _, b in layer_params]
    extra = []
    if linear_skip:
        ws, bs = skip_params
        extra.append(_pad2d(ws, in_pad, out_pad).astype(matmul_dtype))
        bias_rows.append(jnp.pad(bs.reshape(-1).astype(jnp.float32),
                                 (0, max_pad - bs.size)))
    biases = jnp.stack(bias_rows, axis=0)            # (n_bias, max_pad)

    # ---- generation-aware VMEM budget --------------------------------------
    try:
        vmem_cap = int(pltpu.get_tpu_info().vmem_capacity_bytes)
    except Exception:
        vmem_cap = 64 * 1024 * 1024                  # conservative (v7x per-TC)
    vmem_limit = min(int(vmem_cap * 0.75), 112 * 1024 * 1024)

    mm_isz = np.dtype(matmul_dtype).itemsize
    out_isz = np.dtype(out_dtype).itemsize
    pinned_bytes = (sum(int(w.size) * mm_isz for w in (w_packed + extra))
                    + int(biases.size) * 4)

    if pinned_bytes + (8 << 20) > vmem_limit:
        # TODO(synk): backbones whose resident weights exceed the VMEM budget
        # need a per-layer / K-tiled pipeline; fall back to plain XLA here.
        y = backbone_ref(x, layer_params, skip_params, activation=activation,
                         use_residual=use_residual, matmul_dtype=matmul_dtype,
                         gelu_approximate=gelu_approximate)
        return y.astype(out_dtype)

    # per-row VMEM footprint of the pipelined / live tensors (bytes)
    per_row = (2 * in_pad * mm_isz                   # x tile, double-buffered
               + 2 * out_pad * out_isz               # out tile, double-buffered
               + max_pad * 4                         # widest f32 accumulator
               + max_pad * mm_isz                    # bf16 copy for next matmul
               + out_pad * 4)                        # f32 skip / final-sum headroom
    tile_budget = vmem_limit - pinned_bytes - (4 << 20)
    tile_b_cap = max(SUBLANE,
                     min(tile_b_max,
                         (tile_budget // per_row) // SUBLANE * SUBLANE))

    # balanced batch tiling (padding bounded by ~SUBLANE rows per tile); force
    # an even tile count >= 2 when the batch allows so v7x megacore splits it.
    n_tiles = cdiv(batch, tile_b_cap)
    if batch >= 2 * SUBLANE:
        n_tiles = max(n_tiles, 2)
        if n_tiles % 2:
            n_tiles += 1
    tile_b = round_up(cdiv(batch, n_tiles), SUBLANE)
    batch_pad = n_tiles * tile_b

    x_pad = jnp.pad(x, ((0, batch_pad - batch),
                        (0, in_pad - input_dim))).astype(matmul_dtype)

    kernel = make_backbone_kernel(num_layers, widths, out_pad, activation,
                                  use_residual, linear_skip, epilogue_dtype,
                                  gelu_approximate)

    def pinned_spec(shape):
        # Constant-index resident parameter: single-buffered (halves its VMEM).
        return pl.BlockSpec(shape, lambda i: (0,) * len(shape),
                            pipeline_mode=pl.Buffered(1))

    in_specs = [pl.BlockSpec((tile_b, in_pad), lambda i: (i, 0)),
                pinned_spec(biases.shape)]
    in_specs += [pinned_spec(w.shape) for w in w_packed]
    in_specs += [pinned_spec(w.shape) for w in extra]
    out_specs = pl.BlockSpec((tile_b, out_pad), lambda i: (i, 0))

    y_pad = pl.pallas_call(
        kernel,
        out_shape=jax.ShapeDtypeStruct((batch_pad, out_pad), out_dtype),
        grid=(n_tiles,),
        in_specs=in_specs,
        out_specs=out_specs,
        compiler_params=pltpu.CompilerParams(
            dimension_semantics=("parallel",),
            vmem_limit_bytes=vmem_limit,
        ),
    )(x_pad, biases, *w_packed, *extra)

    return y_pad[:batch, :output_dim]


# ----------------------------------------------------------------------------
# Example / self-test
# ----------------------------------------------------------------------------
if __name__ == "__main__":
    def build_backbone(key, input_dim, output_dim, num_layers):
        dims = calculate_dims_linear(input_dim, output_dim, num_layers)
        keys = jax.random.split(key, num_layers + 1)
        layer_params = []
        for i in range(num_layers):
            # xavier_uniform weights, zero biases (matches initialize_weights()).
            w = xavier_uniform(keys[i], dims[i], dims[i + 1])
            b = jnp.zeros((dims[i + 1],), jnp.float32)
            layer_params.append((w, b))
        if input_dim == output_dim:
            skip_params = "identity"
        else:
            skip_params = (
                xavier_uniform(keys[num_layers], input_dim, output_dim),
                jnp.zeros((output_dim,), jnp.float32),
            )
        return layer_params, skip_params

    root = jax.random.PRNGKey(0)
    k1, k2, kx1, kx2 = jax.random.split(root, 4)

    # Case 1: Backbone(input_dim=32, output_dim=16, num_layers=3,
    #                  method='linear', activation='relu', use_residual=True)
    #         -> skip is Linear(32, 16)
    lp1, sp1 = build_backbone(k1, 32, 16, 3)
    x1 = jax.random.normal(kx1, (8, 32), dtype=jnp.float32)
    y1 = jax.block_until_ready(
        backbone_forward(x1, lp1, sp1, activation="relu", use_residual=True))
    y1_ref = backbone_ref(x1, lp1, sp1, activation="relu", use_residual=True)
    assert y1.shape == (8, 16)
    assert jnp.allclose(y1, y1_ref, atol=2e-3, rtol=2e-3), "case1 mismatch"

    # Case 2: Backbone(input_dim=32, output_dim=32, num_layers=2,
    #                  activation='tanh', use_residual=True) -> identity skip
    lp2, sp2 = build_backbone(k2, 32, 32, 2)
    x2 = jax.random.normal(kx2, (8, 32), dtype=jnp.float32)
    y2 = jax.block_until_ready(
        backbone_forward(x2, lp2, sp2, activation="tanh", use_residual=True))
    y2_ref = backbone_ref(x2, lp2, sp2, activation="tanh", use_residual=True)
    assert y2.shape == (8, 32)
    assert jnp.allclose(y2, y2_ref, atol=2e-3, rtol=2e-3), "case2 mismatch"

    print("KERNEL_OK")
</pallas_src>

<mosaic_0001>
module attributes {stable_mosaic.version = 11 : i64} {
  func.func @kernel(%arg0: i32, %arg1: memref<8x128xbf16, #tpu.memory_space<vmem>>, %arg2: memref<4x128xf32, #tpu.memory_space<vmem>>, %arg3: memref<128x128xbf16, #tpu.memory_space<vmem>>, %arg4: memref<128x128xbf16, #tpu.memory_space<vmem>>, %arg5: memref<128x128xbf16, #tpu.memory_space<vmem>>, %arg6: memref<128x128xbf16, #tpu.memory_space<vmem>>, %arg7: memref<8x128xf32, #tpu.memory_space<vmem>>) attributes {dimension_semantics = [#tpu.dimension_semantics<parallel>], iteration_bounds = array<i64: 1>, scalar_prefetch = 0 : i64, scratch_operands = 0 : i64, tpu.core_type = #tpu.core_type<tc>, window_params = [{transform_indices = @transform_0, window_bounds = array<i64: 8, 128>}, {pipeline_mode = #tpu.pipeline_mode<synchronous>, transform_indices = @transform_1, window_bounds = array<i64: 4, 128>}, {pipeline_mode = #tpu.pipeline_mode<synchronous>, transform_indices = @transform_2, window_bounds = array<i64: 128, 128>}, {pipeline_mode = #tpu.pipeline_mode<synchronous>, transform_indices = @transform_3, window_bounds = array<i64: 128, 128>}, {pipeline_mode = #tpu.pipeline_mode<synchronous>, transform_indices = @transform_4, window_bounds = array<i64: 128, 128>}, {pipeline_mode = #tpu.pipeline_mode<synchronous>, transform_indices = @transform_5, window_bounds = array<i64: 128, 128>}, {transform_indices = @transform_6, window_bounds = array<i64: 8, 128>}]} {
    %c0 = arith.constant 0 : index
    %c0_0 = arith.constant 0 : index
    %0 = vector.load %arg1[%c0, %c0_0] : memref<8x128xbf16, #tpu.memory_space<vmem>>, vector<8x128xbf16>
    %c0_1 = arith.constant 0 : index
    %c0_2 = arith.constant 0 : index
    %1 = vector.load %arg3[%c0_1, %c0_2] : memref<128x128xbf16, #tpu.memory_space<vmem>>, vector<128x128xbf16>
    %cst = arith.constant dense<0.000000e+00> : vector<8x128xf32>
    %2 = tpu.matmul %0, %1, %cst {dimension_numbers = #tpu.dot_dimension_numbers<[1], [0], [0], [1], [0, 0, 1, 1], [], []>} : vector<8x128xbf16>, vector<128x128xbf16>, vector<8x128xf32> -> vector<8x128xf32>
    %c0_3 = arith.constant 0 : index
    %c0_4 = arith.constant 0 : index
    %3 = vector.load %arg2[%c0_3, %c0_4] : memref<4x128xf32, #tpu.memory_space<vmem>>, vector<1x128xf32>
    %4 = vector.broadcast %3 : vector<1x128xf32> to vector<8x128xf32>
    %5 = arith.addf %2, %4 : vector<8x128xf32>
    %cst_5 = arith.constant 0.000000e+00 : f32
    %6 = vector.broadcast %cst_5 : f32 to vector<8x128xf32>
    %7 = arith.maximumf %5, %6 : vector<8x128xf32>
    %8 = arith.truncf %7 : vector<8x128xf32> to vector<8x128xbf16>
    %c0_6 = arith.constant 0 : index
    %c0_7 = arith.constant 0 : index
    %9 = vector.load %arg4[%c0_6, %c0_7] : memref<128x128xbf16, #tpu.memory_space<vmem>>, vector<128x128xbf16>
    %cst_8 = arith.constant dense<0.000000e+00> : vector<8x128xf32>
    %10 = tpu.matmul %8, %9, %cst_8 {dimension_numbers = #tpu.dot_dimension_numbers<[1], [0], [0], [1], [0, 0, 1, 1], [], []>} : vector<8x128xbf16>, vector<128x128xbf16>, vector<8x128xf32> -> vector<8x128xf32>
    %c1 = arith.constant 1 : index
    %c0_9 = arith.constant 0 : index
    %11 = vector.load %arg2[%c1, %c0_9] : memref<4x128xf32, #tpu.memory_space<vmem>>, vector<1x128xf32>
    %12 = vector.broadcast %11 : vector<1x128xf32> to vector<8x128xf32>
    %13 = arith.addf %10, %12 : vector<8x128xf32>
    %cst_10 = arith.constant 0.000000e+00 : f32
    %14 = vector.broadcast %cst_10 : f32 to vector<8x128xf32>
    %15 = arith.maximumf %13, %14 : vector<8x128xf32>
    %16 = arith.truncf %15 : vector<8x128xf32> to vector<8x128xbf16>
    %c0_11 = arith.constant 0 : index
    %c0_12 = arith.constant 0 : index
    %17 = vector.load %arg5[%c0_11, %c0_12] : memref<128x128xbf16, #tpu.memory_space<vmem>>, vector<128x128xbf16>
    %cst_13 = arith.constant dense<0.000000e+00> : vector<8x128xf32>
    %18 = tpu.matmul %16, %17, %cst_13 {dimension_numbers = #tpu.dot_dimension_numbers<[1], [0], [0], [1], [0, 0, 1, 1], [], []>} : vector<8x128xbf16>, vector<128x128xbf16>, vector<8x128xf32> -> vector<8x128xf32>
    %c2 = arith.constant 2 : index
    %c0_14 = arith.constant 0 : index
    %19 = vector.load %arg2[%c2, %c0_14] : memref<4x128xf32, #tpu.memory_space<vmem>>, vector<1x128xf32>
    %20 = vector.broadcast %19 : vector<1x128xf32> to vector<8x128xf32>
    %21 = arith.addf %18, %20 : vector<8x128xf32>
    %c0_15 = arith.constant 0 : index
    %c0_16 = arith.constant 0 : index
    %22 = vector.load %arg6[%c0_15, %c0_16] : memref<128x128xbf16, #tpu.memory_space<vmem>>, vector<128x128xbf16>
    %cst_17 = arith.constant dense<0.000000e+00> : vector<8x128xf32>
    %23 = tpu.matmul %0, %22, %cst_17 {dimension_numbers = #tpu.dot_dimension_numbers<[1], [0], [0], [1], [0, 0, 1, 1], [], []>} : vector<8x128xbf16>, vector<128x128xbf16>, vector<8x128xf32> -> vector<8x128xf32>
    %c3 = arith.constant 3 : index
    %c0_18 = arith.constant 0 : index
    %24 = vector.load %arg2[%c3, %c0_18] : memref<4x128xf32, #tpu.memory_space<vmem>>, vector<1x128xf32>
    %25 = vector.broadcast %24 : vector<1x128xf32> to vector<8x128xf32>
    %26 = arith.addf %23, %25 : vector<8x128xf32>
    %27 = arith.addf %21, %26 : vector<8x128xf32>
    %c0_19 = arith.constant 0 : index
    %c0_20 = arith.constant 0 : index
    %28 = vector.load %arg7[%c0_19, %c0_20] : memref<8x128xf32, #tpu.memory_space<vmem>>, vector<8x128xf32>
    tpu.vector_store %arg7[%c0_19, %c0_20], %27 {strides = array<i32>} : memref<8x128xf32, #tpu.memory_space<vmem>>, vector<8x128xf32>,
    return
  }
  func.func @transform_0(%arg0: i32) -> (i32, i32) {
    %c0_i32 = arith.constant 0 : i32
    %c0_i32_0 = arith.constant 0 : i32
    return %arg0, %c0_i32 : i32, i32
  }
  func.func @transform_1(%arg0: i32) -> (i32, i32) {
    %c0_i32 = arith.constant 0 : i32
    %c0_i32_0 = arith.constant 0 : i32
    %c0_i32_1 = arith.constant 0 : i32
    return %c0_i32, %c0_i32_0 : i32, i32
  }
  func.func @transform_2(%arg0: i32) -> (i32, i32) {
    %c0_i32 = arith.constant 0 : i32
    %c0_i32_0 = arith.constant 0 : i32
    %c0_i32_1 = arith.constant 0 : i32
    return %c0_i32, %c0_i32_0 : i32, i32
  }
  func.func @transform_3(%arg0: i32) -> (i32, i32) {
    %c0_i32 = arith.constant 0 : i32
    %c0_i32_0 = arith.constant 0 : i32
    %c0_i32_1 = arith.constant 0 : i32
    return %c0_i32, %c0_i32_0 : i32, i32
  }
  func.func @transform_4(%arg0: i32) -> (i32, i32) {
    %c0_i32 = arith.constant 0 : i32
    %c0_i32_0 = arith.constant 0 : i32
    %c0_i32_1 = arith.constant 0 : i32
    return %c0_i32, %c0_i32_0 : i32, i32
  }
  func.func @transform_5(%arg0: i32) -> (i32, i32) {
    %c0_i32 = arith.constant 0 : i32
    %c0_i32_0 = arith.constant 0 : i32
    %c0_i32_1 = arith.constant 0 : i32
    return %c0_i32, %c0_i32_0 : i32, i32
  }
  func.func @transform_6(%arg0: i32) -> (i32, i32) {
    %c0_i32 = arith.constant 0 : i32
    %c0_i32_0 = arith.constant 0 : i32
    return %arg0, %c0_i32 : i32, i32
  }
}

</mosaic_0001>

<llo_original>
// kernel: tpu_custom_call.1
$region0: #{tpu_custom_call.1}
  #allocation0 [shape = 'u32[]', space=smem, size = 0x4, offset = 0x4, fixed_abs, tag = 'smem constant byte address 0x4 - core index']
  #allocation1 [shape = 'u32[144,128]{1,0:T(1,128)}', space=vmem, size = 0x12000, scoped, tag = 'internal scratch']
  %s0 = inlined_call_operand.hbm [shape: bf16[8,128], index: 0, kind: input, shape index: {}]
  %s1 = inlined_call_operand.hbm [shape: f32[4,128], index: 1, kind: input, shape index: {}]
  %s2 = inlined_call_operand.hbm [shape: bf16[128,128], index: 2, kind: input, shape index: {}]
  %s3 = inlined_call_operand.hbm [shape: bf16[128,128], index: 3, kind: input, shape index: {}]
  %s4 = inlined_call_operand.hbm [shape: bf16[128,128], index: 4, kind: input, shape index: {}]
  %s5 = inlined_call_operand.hbm [shape: bf16[128,128], index: 5, kind: input, shape index: {}]
  %s6 = inlined_call_operand.hbm [shape: f32[8,128], index: 6, kind: output, shape index: {}]
  %s7 = sld [smem:[#allocation0]]
  $region58: #{tpu_custom_call.1} parent=0
    _
  %s9 = ssub.s32 1, %s7
  %s10 = scalar_select 0, %s9, %s7
  $region1: #{tpu_custom_call.1} parent=0
    #allocation2 [shape = 'u8[2048]{0}', space=vmem, size = 0x800, scoped, tag = 'input window, operand 0, single buffered']
    #allocation3 [shape = 's32[1]{0}', space=sflag, size = 0x4, scoped, tag = 'scoped memory for tpu_custom_call.1']
    #allocation4 [shape = 's32[1]{0}', space=sflag, size = 0x4, scoped, tag = 'scoped memory for tpu_custom_call.1']
    #allocation5 [shape = 'u8[2048]{0}', space=vmem, size = 0x800, scoped, tag = 'input window, operand 1, single buffered']
    #allocation6 [shape = 's32[1]{0}', space=sflag, size = 0x4, scoped, tag = 'scoped memory for tpu_custom_call.1']
    #allocation7 [shape = 'u8[32768]{0}', space=vmem, size = 0x8000, scoped, tag = 'input window, operand 2, single buffered']
    #allocation8 [shape = 'u8[32768]{0}', space=vmem, size = 0x8000, scoped, tag = 'input window, operand 3, single buffered']
    #allocation9 [shape = 's32[1]{0}', space=sflag, size = 0x4, scoped, tag = 'scoped memory for tpu_custom_call.1']
    #allocation10 [shape = 'u8[32768]{0}', space=vmem, size = 0x8000, scoped, tag = 'input window, operand 4, single buffered']
    #allocation11 [shape = 'u8[32768]{0}', space=vmem, size = 0x8000, scoped, tag = 'input window, operand 5, single buffered']
    #allocation12 [shape = 's32[1]{0}', space=sflag, size = 0x4, scoped, tag = 'scoped memory for tpu_custom_call.1']
    #allocation13 [shape = 'u8[4096]{0}', space=vmem, size = 0x1000, scoped, tag = 'output window, operand 0, single buffered']
    %11 = vsyncpa [#allocation3], 0
    %12 = vsyncpa [#allocation6], 0
    %13 = vsyncpa [#allocation9], 0
    %14 = vsyncpa [#allocation12], 0
    %15 = vsyncpa [#allocation4], 0
    // Predicated region
    $region2: #{tpu_custom_call.1} parent=1 // pred_check
      _
    $region3: #{tpu_custom_call.1} parent=1 // pred_check_branch
      %17 = sbr.rel (0) target = $region5
    $region4: #{tpu_custom_call.1} parent=1 // pred_region
      %s19 = ssub.s32 64, 64
      %20 = vsyncadd [#allocation3], %s19
      %s22 = sshll.u32 [#allocation2], 4
      %s23 = int_to_ptr.vmem [resolvable:$true] %s22
      %25 = dma.hbm_to_vmem [thread:$0]  %s0, 64, %s23, [#allocation3]
    $region5: #{tpu_custom_call.1} parent=1 // pred_fallthru
      _
    // Predicated region
    $region6: #{tpu_custom_call.1} parent=1 // pred_check
      _
    $region7: #{tpu_custom_call.1} parent=1 // pred_check_branch
      %27 = sbr.rel (0) target = $region9
    $region8: #{tpu_custom_call.1} parent=1 // pred_region
      %s29 = ssub.s32 64, 64
      %30 = vsyncadd [#allocation6], %s29
      %s32 = sshll.u32 [#allocation5], 4
      %s33 = int_to_ptr.vmem [resolvable:$true] %s32
      %35 = dma.hbm_to_vmem [thread:$0]  %s1, 64, %s33, [#allocation6]
    $region9: #{tpu_custom_call.1} parent=1 // pred_fallthru
      _
    // Predicated region
    $region10: #{tpu_custom_call.1} parent=1 // pred_check
      _
    $region11: #{tpu_custom_call.1} parent=1 // pred_check_branch
      %37 = sbr.rel (0) target = $region13
    $region12: #{tpu_custom_call.1} parent=1 // pred_region
      %s39 = ssub.s32 1024, 1024
      %40 = vsyncadd [#allocation6], %s39
      %s41 = sshll.u32 [#allocation7], 4
      %s42 = int_to_ptr.vmem [resolvable:$true] %s41
      %47 = dma.hbm_to_vmem [thread:$0]  %s2, 1024, %s42, [#allocation6], 64, 64, 4
    $region13: #{tpu_custom_call.1} parent=1 // pred_fallthru
      _
    // Predicated region
    $region14: #{tpu_custom_call.1} parent=1 // pred_check
      _
    $region15: #{tpu_custom_call.1} parent=1 // pred_check_branch
      %49 = sbr.rel (0) target = $region17
    $region16: #{tpu_custom_call.1} parent=1 // pred_region
      %s51 = ssub.s32 1024, 1024
      %52 = vsyncadd [#allocation9], %s51
      %s53 = sshll.u32 [#allocation8], 4
      %s54 = int_to_ptr.vmem [resolvable:$true] %s53
      %59 = dma.hbm_to_vmem [thread:$0]  %s3, 1024, %s54, [#allocation9], 64, 64, 4
    $region17: #{tpu_custom_call.1} parent=1 // pred_fallthru
      _
    // Predicated region
    $region18: #{tpu_custom_call.1} parent=1 // pred_check
      _
    $region19: #{tpu_custom_call.1} parent=1 // pred_check_branch
      %61 = sbr.rel (0) target = $region21
    $region20: #{tpu_custom_call.1} parent=1 // pred_region
      %s63 = ssub.s32 1024, 1024
      %64 = vsyncadd [#allocation9], %s63
      %s65 = sshll.u32 [#allocation10], 4
      %s66 = int_to_ptr.vmem [resolvable:$true] %s65
      %71 = dma.hbm_to_vmem [thread:$0]  %s4, 1024, %s66, [#allocation9], 64, 64, 4
    $region21: #{tpu_custom_call.1} parent=1 // pred_fallthru
      _
    // Predicated region
    $region22: #{tpu_custom_call.1} parent=1 // pred_check
      _
    $region23: #{tpu_custom_call.1} parent=1 // pred_check_branch
      %73 = sbr.rel (0) target = $region25
    $region24: #{tpu_custom_call.1} parent=1 // pred_region
      %s75 = ssub.s32 1024, 1024
      %76 = vsyncadd [#allocation12], %s75
      %s77 = sshll.u32 [#allocation11], 4
      %s78 = int_to_ptr.vmem [resolvable:$true] %s77
      %83 = dma.hbm_to_vmem [thread:$0]  %s5, 1024, %s78, [#allocation12], 64, 64, 4
    $region25: #{tpu_custom_call.1} parent=1 // pred_fallthru
      _
    // Predicated region
    $region26: #{tpu_custom_call.1} parent=1 // pred_check
      _
    $region27: #{tpu_custom_call.1} parent=1 // pred_check_branch
      %85 = sbr.rel (0) target = $region29
    $region28: #{tpu_custom_call.1} parent=1 // pred_region
      %86 = dma.done [#allocation3], 64
    $region29: #{tpu_custom_call.1} parent=1 // pred_fallthru
      _
    // Predicated region
    $region30: #{tpu_custom_call.1} parent=1 // pred_check
      _
    $region31: #{tpu_custom_call.1} parent=1 // pred_check_branch
      %88 = sbr.rel (0) target = $region33
    $region32: #{tpu_custom_call.1} parent=1 // pred_region
      %89 = dma.done [#allocation6], 64
    $region33: #{tpu_custom_call.1} parent=1 // pred_fallthru
      _
    // Predicated region
    $region34: #{tpu_custom_call.1} parent=1 // pred_check
      _
    $region35: #{tpu_custom_call.1} parent=1 // pred_check_branch
      %91 = sbr.rel (0) target = $region37
    $region36: #{tpu_custom_call.1} parent=1 // pred_region
      %92 = dma.done [#allocation6], 1024
    $region37: #{tpu_custom_call.1} parent=1 // pred_fallthru
      _
    // Predicated region
    $region38: #{tpu_custom_call.1} parent=1 // pred_check
      _
    $region39: #{tpu_custom_call.1} parent=1 // pred_check_branch
      %94 = sbr.rel (0) target = $region41
    $region40: #{tpu_custom_call.1} parent=1 // pred_region
      %95 = dma.done [#allocation9], 1024
    $region41: #{tpu_custom_call.1} parent=1 // pred_fallthru
      _
    // Predicated region
    $region42: #{tpu_custom_call.1} parent=1 // pred_check
      _
    $region43: #{tpu_custom_call.1} parent=1 // pred_check_branch
      %97 = sbr.rel (0) target = $region45
    $region44: #{tpu_custom_call.1} parent=1 // pred_region
      %98 = dma.done [#allocation9], 1024
    $region45: #{tpu_custom_call.1} parent=1 // pred_fallthru
      _
    // Predicated region
    $region46: #{tpu_custom_call.1} parent=1 // pred_check
      _
    $region47: #{tpu_custom_call.1} parent=1 // pred_check_branch
      %100 = sbr.rel (0) target = $region49
    $region48: #{tpu_custom_call.1} parent=1 // pred_region
      %101 = dma.done [#allocation12], 1024
    $region49: #{tpu_custom_call.1} parent=1 // pred_fallthru
      _
    %v103 = vld [vmem:[#allocation2] sm:$0xf]
    %v104 = vld [vmem:[#allocation7] sm:$0xf]
    %v105 = vld [vmem:[#allocation7 + $0x4] sm:$0xf]
    %v106 = vld [vmem:[#allocation7 + $0x8] sm:$0xf]
    %v107 = vld [vmem:[#allocation7 + $0xc] sm:$0xf]
    %v108 = vld [vmem:[#allocation7 + $0x10] sm:$0xf]
    %v109 = vld [vmem:[#allocation7 + $0x14] sm:$0xf]
    %v110 = vld [vmem:[#allocation7 + $0x18] sm:$0xf]
    %v111 = vld [vmem:[#allocation7 + $0x1c] sm:$0xf]
    %v112 = vld [vmem:[#allocation7 + $0x20] sm:$0xf]
    %v113 = vld [vmem:[#allocation7 + $0x24] sm:$0xf]
    %v114 = vld [vmem:[#allocation7 + $0x28] sm:$0xf]
    %v115 = vld [vmem:[#allocation7 + $0x2c] sm:$0xf]
    %v116 = vld [vmem:[#allocation7 + $0x30] sm:$0xf]
    %v117 = vld [vmem:[#allocation7 + $0x34] sm:$0xf]
    %v118 = vld [vmem:[#allocation7 + $0x38] sm:$0xf]
    %v119 = vld [vmem:[#allocation7 + $0x3c] sm:$0xf]
    %v120 = vld [vmem:[#allocation5] sm:$0x1]
    %v121 = vlaneseq
    %v122 = vshrl.u32 %v121, 7
    %v123 = vsub.s32 0, %v122
    %v124 = vrot.slane %v120, %v123
    %v141 = vunpack.c.l.b16 %v104
    %v142 = vunpack.c.l.b16 %v105
    %v143 = vunpack.c.l.b16 %v106
    %v144 = vunpack.c.l.b16 %v107
    %v145 = vunpack.c.l.b16 %v108
    %v146 = vunpack.c.l.b16 %v109
    %v147 = vunpack.c.l.b16 %v110
    %v148 = vunpack.c.l.b16 %v111
    %v149 = vunpack.c.l.b16 %v112
    %v150 = vunpack.c.l.b16 %v113
    %v151 = vunpack.c.l.b16 %v114
    %v152 = vunpack.c.l.b16 %v115
    %v153 = vunpack.c.l.b16 %v116
    %v154 = vunpack.c.l.b16 %v117
    %v155 = vunpack.c.l.b16 %v118
    %v156 = vunpack.c.l.b16 %v119
    %v157 = vpack.c.b16 %v142, %v141
    %v158 = vpack.c.b16 %v144, %v143
    %v159 = vpack.c.b16 %v146, %v145
    %v160 = vpack.c.b16 %v148, %v147
    %v161 = vpack.c.b16 %v150, %v149
    %v162 = vpack.c.b16 %v152, %v151
    %v163 = vpack.c.b16 %v154, %v153
    %v164 = vpack.c.b16 %v156, %v155
    %173 = vmatprep.subr.bf16.mxu0 0
    %174 = vmatpush1.bf16.msra.mxu0 %v157
    %175 = vmatprep.subr.bf16.mxu0 0
    %176 = vmatpush1.bf16.msra.mxu0 %v158
    %177 = vmatprep.subr.bf16.mxu0 0
    %178 = vmatpush1.bf16.msra.mxu0 %v159
    %179 = vmatprep.subr.bf16.mxu0 0
    %180 = vmatpush1.bf16.msra.mxu0 %v160
    %181 = vmatprep.subr.bf16.mxu0 0
    %182 = vmatpush1.bf16.msra.mxu0 %v161
    %183 = vmatprep.subr.bf16.mxu0 0
    %184 = vmatpush1.bf16.msra.mxu0 %v162
    %185 = vmatprep.subr.bf16.mxu0 0
    %186 = vmatpush1.bf16.msra.mxu0 %v163
    %187 = vmatprep.subr.bf16.mxu0 0
    %188 = vmatpush1.bf16.msra.mxu0 %v164
    %189 = vmatprep.subr.bf16.mxu0 0
    %190 = vmatpush1.bf16.msra.mxu0 0
    %191 = vmatprep.subr.bf16.mxu0 0
    %192 = vmatpush1.bf16.msra.mxu0 0
    %193 = vmatprep.subr.bf16.mxu0 0
    %194 = vmatpush1.bf16.msra.mxu0 0
    %195 = vmatprep.subr.bf16.mxu0 0
    %196 = vmatpush1.bf16.msra.mxu0 0
    %197 = vmatprep.subr.bf16.mxu0 0
    %198 = vmatpush1.bf16.msra.mxu0 0
    %199 = vmatprep.subr.bf16.mxu0 0
    %200 = vmatpush1.bf16.msra.mxu0 0
    %201 = vmatprep.subr.bf16.mxu0 0
    %202 = vmatpush1.bf16.msra.mxu0 0
    %203 = vmatprep.subr.bf16.mxu0 0
    %204 = vmatpush1.bf16.msra.mxu0 0
    %205 = vmatprep.mubr.bf16.mxu0 0
    %206 = vmatmul.mubr.bf16.gmra.mrb[0].mxu0 %v103
    %v207 = vpop.f32.mrb[0].mxu0
    %v208 = vadd.f32 %v124, %v207
    %v209 = vpop.f32.mrb[0].mxu0
    %v210 = vpop.f32.mrb[0].mxu0
    %v211 = vpop.f32.mrb[0].mxu0
    %212 = vdwg.mxu0
    %v213 = vmax.f32 %v208, 0.0
    %v214 = vpack.c.bf16 %v213, %v213
    %v215 = vld [vmem:[#allocation8] sm:$0xf]
    %v216 = vld [vmem:[#allocation8 + $0x4] sm:$0xf]
    %v217 = vld [vmem:[#allocation8 + $0x8] sm:$0xf]
    %v218 = vld [vmem:[#allocation8 + $0xc] sm:$0xf]
    %v219 = vld [vmem:[#allocation8 + $0x10] sm:$0xf]
    %v220 = vld [vmem:[#allocation8 + $0x14] sm:$0xf]
    %v221 = vld [vmem:[#allocation8 + $0x18] sm:$0xf]
    %v222 = vld [vmem:[#allocation8 + $0x1c] sm:$0xf]
    %v223 = vld [vmem:[#allocation8 + $0x20] sm:$0xf]
    %v224 = vld [vmem:[#allocation8 + $0x24] sm:$0xf]
    %v225 = vld [vmem:[#allocation8 + $0x28] sm:$0xf]
    %v226 = vld [vmem:[#allocation8 + $0x2c] sm:$0xf]
    %v227 = vld [vmem:[#allocation8 + $0x30] sm:$0xf]
    %v228 = vld [vmem:[#allocation8 + $0x34] sm:$0xf]
    %v229 = vld [vmem:[#allocation8 + $0x38] sm:$0xf]
    %v230 = vld [vmem:[#allocation8 + $0x3c] sm:$0xf]
    %v231 = vld [vmem:[#allocation5 + $0x1] sm:$0x1]
    %v232 = vlaneseq
    %v233 = vshrl.u32 %v232, 7
    %v234 = vsub.s32 0, %v233
    %v235 = vrot.slane %v231, %v234
    %v252 = vunpack.c.l.b16 %v215
    %v253 = vunpack.c.l.b16 %v216
    %v254 = vunpack.c.l.b16 %v217
    %v255 = vunpack.c.l.b16 %v218
    %v256 = vunpack.c.l.b16 %v219
    %v257 = vunpack.c.l.b16 %v220
    %v258 = vunpack.c.l.b16 %v221
    %v259 = vunpack.c.l.b16 %v222
    %v260 = vunpack.c.l.b16 %v223
    %v261 = vunpack.c.l.b16 %v224
    %v262 = vunpack.c.l.b16 %v225
    %v263 = vunpack.c.l.b16 %v226
    %v264 = vunpack.c.l.b16 %v227
    %v265 = vunpack.c.l.b16 %v228
    %v266 = vunpack.c.l.b16 %v229
    %v267 = vunpack.c.l.b16 %v230
    %v268 = vpack.c.b16 %v253, %v252
    %v269 = vpack.c.b16 %v255, %v254
    %v270 = vpack.c.b16 %v257, %v256
    %v271 = vpack.c.b16 %v259, %v258
    %v272 = vpack.c.b16 %v261, %v260
    %v273 = vpack.c.b16 %v263, %v262
    %v274 = vpack.c.b16 %v265, %v264
    %v275 = vpack.c.b16 %v267, %v266
    %284 = vmatprep.subr.bf16.mxu0 0
    %285 = vmatpush1.bf16.msra.mxu0 %v268
    %286 = vmatprep.subr.bf16.mxu0 0
    %287 = vmatpush1.bf16.msra.mxu0 %v269
    %288 = vmatprep.subr.bf16.mxu0 0
    %289 = vmatpush1.bf16.msra.mxu0 %v270
    %290 = vmatprep.subr.bf16.mxu0 0
    %291 = vmatpush1.bf16.msra.mxu0 %v271
    %292 = vmatprep.subr.bf16.mxu0 0
    %293 = vmatpush1.bf16.msra.mxu0 %v272
    %294 = vmatprep.subr.bf16.mxu0 0
    %295 = vmatpush1.bf16.msra.mxu0 %v273
    %296 = vmatprep.subr.bf16.mxu0 0
    %297 = vmatpush1.bf16.msra.mxu0 %v274
    %298 = vmatprep.subr.bf16.mxu0 0
    %299 = vmatpush1.bf16.msra.mxu0 %v275
    %300 = vmatprep.subr.bf16.mxu0 0
    %301 = vmatpush1.bf16.msra.mxu0 0
    %302 = vmatprep.subr.bf16.mxu0 0
    %303 = vmatpush1.bf16.msra.mxu0 0
    %304 = vmatprep.subr.bf16.mxu0 0
    %305 = vmatpush1.bf16.msra.mxu0 0
    %306 = vmatprep.subr.bf16.mxu0 0
    %307 = vmatpush1.bf16.msra.mxu0 0
    %308 = vmatprep.subr.bf16.mxu0 0
    %309 = vmatpush1.bf16.msra.mxu0 0
    %310 = vmatprep.subr.bf16.mxu0 0
    %311 = vmatpush1.bf16.msra.mxu0 0
    %312 = vmatprep.subr.bf16.mxu0 0
    %313 = vmatpush1.bf16.msra.mxu0 0
    %314 = vmatprep.subr.bf16.mxu0 0
    %315 = vmatpush1.bf16.msra.mxu0 0
    %316 = vmatprep.mubr.bf16.mxu0 0
    %317 = vmatmul.mubr.bf16.gmra.mrb[0].mxu0 %v214
    %v318 = vpop.f32.mrb[0].mxu0
    %v319 = vadd.f32 %v235, %v318
    %v320 = vpop.f32.mrb[0].mxu0
    %v321 = vpop.f32.mrb[0].mxu0
    %v322 = vpop.f32.mrb[0].mxu0
    %323 = vdwg.mxu0
    %v324 = vmax.f32 %v319, 0.0
    %v325 = vpack.c.bf16 %v324, %v324
    %v326 = vld [vmem:[#allocation10] sm:$0xf]
    %v327 = vld [vmem:[#allocation10 + $0x4] sm:$0xf]
    %v328 = vld [vmem:[#allocation10 + $0x8] sm:$0xf]
    %v329 = vld [vmem:[#allocation10 + $0xc] sm:$0xf]
    %v330 = vld [vmem:[#allocation10 + $0x10] sm:$0xf]
    %v331 = vld [vmem:[#allocation10 + $0x14] sm:$0xf]
    %v332 = vld [vmem:[#allocation10 + $0x18] sm:$0xf]
    %v333 = vld [vmem:[#allocation10 + $0x1c] sm:$0xf]
    %v334 = vld [vmem:[#allocation10 + $0x20] sm:$0xf]
    %v335 = vld [vmem:[#allocation10 + $0x24] sm:$0xf]
    %v336 = vld [vmem:[#allocation10 + $0x28] sm:$0xf]
    %v337 = vld [vmem:[#allocation10 + $0x2c] sm:$0xf]
    %v338 = vld [vmem:[#allocation10 + $0x30] sm:$0xf]
    %v339 = vld [vmem:[#allocation10 + $0x34] sm:$0xf]
    %v340 = vld [vmem:[#allocation10 + $0x38] sm:$0xf]
    %v341 = vld [vmem:[#allocation10 + $0x3c] sm:$0xf]
    %v342 = vld [vmem:[#allocation5 + $0x2] sm:$0x1]
    %v343 = vlaneseq
    %v344 = vshrl.u32 %v343, 7
    %v345 = vsub.s32 0, %v344
    %v346 = vrot.slane %v342, %v345
    %v363 = vunpack.c.l.b16 %v326
    %v364 = vunpack.c.l.b16 %v327
    %v365 = vunpack.c.l.b16 %v328
    %v366 = vunpack.c.l.b16 %v329
    %v367 = vunpack.c.l.b16 %v330
    %v368 = vunpack.c.l.b16 %v331
    %v369 = vunpack.c.l.b16 %v332
    %v370 = vunpack.c.l.b16 %v333
    %v371 = vunpack.c.l.b16 %v334
    %v372 = vunpack.c.l.b16 %v335
    %v373 = vunpack.c.l.b16 %v336
    %v374 = vunpack.c.l.b16 %v337
    %v375 = vunpack.c.l.b16 %v338
    %v376 = vunpack.c.l.b16 %v339
    %v377 = vunpack.c.l.b16 %v340
    %v378 = vunpack.c.l.b16 %v341
    %v379 = vpack.c.b16 %v364, %v363
    %v380 = vpack.c.b16 %v366, %v365
    %v381 = vpack.c.b16 %v368, %v367
    %v382 = vpack.c.b16 %v370, %v369
    %v383 = vpack.c.b16 %v372, %v371
    %v384 = vpack.c.b16 %v374, %v373
    %v385 = vpack.c.b16 %v376, %v375
    %v386 = vpack.c.b16 %v378, %v377
    %395 = vmatprep.subr.bf16.mxu0 0
    %396 = vmatpush1.bf16.msra.mxu0 %v379
    %397 = vmatprep.subr.bf16.mxu0 0
    %398 = vmatpush1.bf16.msra.mxu0 %v380
    %399 = vmatprep.subr.bf16.mxu0 0
    %400 = vmatpush1.bf16.msra.mxu0 %v381
    %401 = vmatprep.subr.bf16.mxu0 0
    %402 = vmatpush1.bf16.msra.mxu0 %v382
    %403 = vmatprep.subr.bf16.mxu0 0
    %404 = vmatpush1.bf16.msra.mxu0 %v383
    %405 = vmatprep.subr.bf16.mxu0 0
    %406 = vmatpush1.bf16.msra.mxu0 %v384
    %407 = vmatprep.subr.bf16.mxu0 0
    %408 = vmatpush1.bf16.msra.mxu0 %v385
    %409 = vmatprep.subr.bf16.mxu0 0
    %410 = vmatpush1.bf16.msra.mxu0 %v386
    %411 = vmatprep.subr.bf16.mxu0 0
    %412 = vmatpush1.bf16.msra.mxu0 0
    %413 = vmatprep.subr.bf16.mxu0 0
    %414 = vmatpush1.bf16.msra.mxu0 0
    %415 = vmatprep.subr.bf16.mxu0 0
    %416 = vmatpush1.bf16.msra.mxu0 0
    %417 = vmatprep.subr.bf16.mxu0 0
    %418 = vmatpush1.bf16.msra.mxu0 0
    %419 = vmatprep.subr.bf16.mxu0 0
    %420 = vmatpush1.bf16.msra.mxu0 0
    %421 = vmatprep.subr.bf16.mxu0 0
    %422 = vmatpush1.bf16.msra.mxu0 0
    %423 = vmatprep.subr.bf16.mxu0 0
    %424 = vmatpush1.bf16.msra.mxu0 0
    %425 = vmatprep.subr.bf16.mxu0 0
    %426 = vmatpush1.bf16.msra.mxu0 0
    %427 = vmatprep.mubr.bf16.mxu0 0
    %428 = vmatmul.mubr.bf16.gmra.mrb[0].mxu0 %v325
    %v429 = vpop.f32.mrb[0].mxu0
    %v430 = vadd.f32 %v346, %v429
    %v431 = vpop.f32.mrb[0].mxu0
    %v432 = vpop.f32.mrb[0].mxu0
    %v433 = vpop.f32.mrb[0].mxu0
    %434 = vdwg.mxu0
    %v435 = vld [vmem:[#allocation11] sm:$0xf]
    %v436 = vld [vmem:[#allocation11 + $0x4] sm:$0xf]
    %v437 = vld [vmem:[#allocation11 + $0x8] sm:$0xf]
    %v438 = vld [vmem:[#allocation11 + $0xc] sm:$0xf]
    %v439 = vld [vmem:[#allocation11 + $0x10] sm:$0xf]
    %v440 = vld [vmem:[#allocation11 + $0x14] sm:$0xf]
    %v441 = vld [vmem:[#allocation11 + $0x18] sm:$0xf]
    %v442 = vld [vmem:[#allocation11 + $0x1c] sm:$0xf]
    %v443 = vld [vmem:[#allocation11 + $0x20] sm:$0xf]
    %v444 = vld [vmem:[#allocation11 + $0x24] sm:$0xf]
    %v445 = vld [vmem:[#allocation11 + $0x28] sm:$0xf]
    %v446 = vld [vmem:[#allocation11 + $0x2c] sm:$0xf]
    %v447 = vld [vmem:[#allocation11 + $0x30] sm:$0xf]
    %v448 = vld [vmem:[#allocation11 + $0x34] sm:$0xf]
    %v449 = vld [vmem:[#allocation11 + $0x38] sm:$0xf]
    %v450 = vld [vmem:[#allocation11 + $0x3c] sm:$0xf]
    %v451 = vld [vmem:[#allocation5 + $0x3] sm:$0x1]
    %v452 = vlaneseq
    %v453 = vshrl.u32 %v452, 7
    %v454 = vsub.s32 0, %v453
    %v455 = vrot.slane %v451, %v454
    %v472 = vunpack.c.l.b16 %v435
    %v473 = vunpack.c.l.b16 %v436
    %v474 = vunpack.c.l.b16 %v437
    %v475 = vunpack.c.l.b16 %v438
    %v476 = vunpack.c.l.b16 %v439
    %v477 = vunpack.c.l.b16 %v440
    %v478 = vunpack.c.l.b16 %v441
    %v479 = vunpack.c.l.b16 %v442
    %v480 = vunpack.c.l.b16 %v443
    %v481 = vunpack.c.l.b16 %v444
    %v482 = vunpack.c.l.b16 %v445
    %v483 = vunpack.c.l.b16 %v446
    %v484 = vunpack.c.l.b16 %v447
    %v485 = vunpack.c.l.b16 %v448
    %v486 = vunpack.c.l.b16 %v449
    %v487 = vunpack.c.l.b16 %v450
    %v488 = vpack.c.b16 %v473, %v472
    %v489 = vpack.c.b16 %v475, %v474
    %v490 = vpack.c.b16 %v477, %v476
    %v491 = vpack.c.b16 %v479, %v478
    %v492 = vpack.c.b16 %v481, %v480
    %v493 = vpack.c.b16 %v483, %v482
    %v494 = vpack.c.b16 %v485, %v484
    %v495 = vpack.c.b16 %v487, %v486
    %504 = vmatprep.subr.bf16.mxu0 0
    %505 = vmatpush1.bf16.msra.mxu0 %v488
    %506 = vmatprep.subr.bf16.mxu0 0
    %507 = vmatpush1.bf16.msra.mxu0 %v489
    %508 = vmatprep.subr.bf16.mxu0 0
    %509 = vmatpush1.bf16.msra.mxu0 %v490
    %510 = vmatprep.subr.bf16.mxu0 0
    %511 = vmatpush1.bf16.msra.mxu0 %v491
    %512 = vmatprep.subr.bf16.mxu0 0
    %513 = vmatpush1.bf16.msra.mxu0 %v492
    %514 = vmatprep.subr.bf16.mxu0 0
    %515 = vmatpush1.bf16.msra.mxu0 %v493
    %516 = vmatprep.subr.bf16.mxu0 0
    %517 = vmatpush1.bf16.msra.mxu0 %v494
    %518 = vmatprep.subr.bf16.mxu0 0
    %519 = vmatpush1.bf16.msra.mxu0 %v495
    %520 = vmatprep.subr.bf16.mxu0 0
    %521 = vmatpush1.bf16.msra.mxu0 0
    %522 = vmatprep.subr.bf16.mxu0 0
    %523 = vmatpush1.bf16.msra.mxu0 0
    %524 = vmatprep.subr.bf16.mxu0 0
    %525 = vmatpush1.bf16.msra.mxu0 0
    %526 = vmatprep.subr.bf16.mxu0 0
    %527 = vmatpush1.bf16.msra.mxu0 0
    %528 = vmatprep.subr.bf16.mxu0 0
    %529 = vmatpush1.bf16.msra.mxu0 0
    %530 = vmatprep.subr.bf16.mxu0 0
    %531 = vmatpush1.bf16.msra.mxu0 0
    %532 = vmatprep.subr.bf16.mxu0 0
    %533 = vmatpush1.bf16.msra.mxu0 0
    %534 = vmatprep.subr.bf16.mxu0 0
    %535 = vmatpush1.bf16.msra.mxu0 0
    %536 = vmatprep.mubr.bf16.mxu0 0
    %537 = vmatmul.mubr.bf16.gmra.mrb[0].mxu0 %v103
    %v538 = vpop.f32.mrb[0].mxu0
    %v539 = vadd.f32 %v455, %v538
    %v540 = vpop.f32.mrb[0].mxu0
    %v541 = vpop.f32.mrb[0].mxu0
    %v542 = vpop.f32.mrb[0].mxu0
    %543 = vdwg.mxu0
    %v544 = vadd.f32 %v430, %v539
    %545 = vst [vmem:[#allocation13] sm:$0xff] %v544
    // Predicated region
    $region50: #{tpu_custom_call.1} parent=1 // pred_check
      _
    $region51: #{tpu_custom_call.1} parent=1 // pred_check_branch
      %547 = sbr.rel (0) target = $region53
    $region52: #{tpu_custom_call.1} parent=1 // pred_region
      %s549 = ssub.s32 128, 128
      %550 = vsyncadd [#allocation4], %s549
      %s552 = sshll.u32 [#allocation13], 4
      %s553 = int_to_ptr.vmem [resolvable:$true] %s552
      %555 = dma.vmem_to_hbm [thread:$0]  %s553, 128, %s6, [#allocation4]
    $region53: #{tpu_custom_call.1} parent=1 // pred_fallthru
      _
    // Predicated region
    $region54: #{tpu_custom_call.1} parent=1 // pred_check
      _
    $region55: #{tpu_custom_call.1} parent=1 // pred_check_branch
      %557 = sbr.rel (0) target = $region57
    $region56: #{tpu_custom_call.1} parent=1 // pred_region
      %558 = dma.done [#allocation4], 128
    $region57: #{tpu_custom_call.1} parent=1 // pred_fallthru
      _
    %559 = vsyncpa [#allocation3], 1
    %560 = vsyncpa [#allocation6], 1
    %561 = vsyncpa [#allocation9], 1
    %562 = vsyncpa [#allocation12], 1
    %563 = vsyncpa [#allocation4], 1

</llo_original>
